<compile_context>
chip_gen: v5e
topology: v5e:2x2
jax: 0.10.0
libtpu: 0.0.40
codegen_flags: <defaults>
</compile_context>

<pallas_src>
import jax
import jax.numpy as jnp
from jax.experimental import pallas as pl
from jax.experimental.pallas import tpu as pltpu


def _round_up(a, b):
    return (a + b - 1) // b * b


def gpa_kernel(x_ref, w1_ref, b1_ref, w2_ref, b2_ref, w3_ref, b3_ref, o_ref):
    # x tile arrives as f32 straight from HBM (single HBM pass); cast to bf16 on the VPU.
    x = x_ref[...].astype(jnp.bfloat16)                                   # (tm, D)

    # layer 1: Linear(D, 64) + ReLU  (bf16 MXU operands, f32 accumulation)
    h1 = jnp.dot(x, w1_ref[...], preferred_element_type=jnp.float32)      # (tm, 64) f32
    h1 = jnp.maximum(h1.astype(b1_ref.dtype) + b1_ref[...], 0)            # bias dtype = epilogue dtype
    h1 = h1.astype(jnp.bfloat16)

    # layer 2: Linear(64, 32) + ReLU
    h2 = jnp.dot(h1, w2_ref[...], preferred_element_type=jnp.float32)     # (tm, 32) f32
    h2 = jnp.maximum(h2.astype(b2_ref.dtype) + b2_ref[...], 0)

    # layer 3: Linear(32, 1) as VPU multiply + lane reduction (keepdims -> (tm, 1) column,
    # which matches the (tm, 1) output block: no sublane->lane relayout, tiny writeback).
    a = jnp.sum(h2 * w3_ref[...], axis=-1, keepdims=True) + b3_ref[...]   # (tm, 1) f32

    # sigmoid on the EUP
    o_ref[...] = jax.nn.sigmoid(a).astype(o_ref.dtype)


def _choose_tile(batch, tm):
    """Pick the batch tile: big (amortize step overhead), legal (mult. of 8 or == batch),
    and >= 2 tiles when the batch is large enough to shard across v7x's two cores."""
    tm = max(8, _round_up(int(tm), 8))
    if batch > tm:
        return tm                      # >= 2 tiles; ragged last tile is masked by Pallas
    if batch >= 1024 and batch % 16 == 0:
        return batch // 2              # two equal tiles -> both v7x TensorCores get work
    return batch                       # single tile; block dim == full array dim is legal


def _default_bf16_epilogue():
    """bf16 VALU exists on v6e/v7x; keep f32 epilogues on v5e and older (and if unsure)."""
    try:
        kind = jax.devices()[0].device_kind.lower()
    except Exception:
        return False
    return not any(t in kind for t in ("v2", "v3", "v4", "v5"))


def gpa_forward(x, params, *, tm=8192, bf16_epilogue=None):
    """x: [B, D] float32. params: dict of weights/biases. Returns [B, 1] float32."""
    B, D = x.shape
    if bf16_epilogue is None:
        bf16_epilogue = _default_bf16_epilogue()
    act_dtype = jnp.bfloat16 if bf16_epilogue else jnp.float32

    tm_eff = _choose_tile(B, tm)
    num_tiles = pl.cdiv(B, tm_eff)     # ragged last tile handled by Pallas masking, no jnp.pad

    x = x.astype(jnp.float32)          # no wrapper bf16 pass over x; cast happens in-kernel
    w1 = params["w1"].astype(jnp.bfloat16)                 # (D, 64)
    b1 = params["b1"].reshape(1, -1).astype(act_dtype)     # (1, 64)
    w2 = params["w2"].astype(jnp.bfloat16)                 # (64, 32)
    b2 = params["b2"].reshape(1, -1).astype(act_dtype)     # (1, 32)
    w3 = params["w3"].reshape(1, -1).astype(jnp.float32)   # (1, 32) row vector (f32 for accuracy)
    b3 = params["b3"].reshape(1, 1).astype(jnp.float32)    # (1, 1)

    # Grid-invariant operands: constant index_map -> fetched once, no per-step DMA.
    const = lambda arr: pl.BlockSpec(arr.shape, lambda i: (0, 0))

    flops = 2 * B * (D * 64 + 64 * 32 + 32)
    bytes_accessed = (x.size * 4 + w1.size * 2 + w2.size * 2
                      + b1.size * b1.dtype.itemsize + b2.size * b2.dtype.itemsize
                      + (w3.size + b3.size) * 4 + B * 4)

    out = pl.pallas_call(
        gpa_kernel,
        out_shape=jax.ShapeDtypeStruct((B, 1), jnp.float32),
        grid_spec=pltpu.PrefetchScalarGridSpec(
            num_scalar_prefetch=0,
            grid=(num_tiles,),
            in_specs=[
                pl.BlockSpec((tm_eff, D), lambda i: (i, 0)),   # x tile (pipelined over batch)
                const(w1), const(b1),
                const(w2), const(b2),
                const(w3), const(b3),
            ],
            out_specs=pl.BlockSpec((tm_eff, 1), lambda i: (i, 0)),  # (tm,1) column per step
        ),
        compiler_params=pltpu.CompilerParams(
            dimension_semantics=("parallel",),           # shards tiles across v7x cores
            vmem_limit_bytes=48 * 1024 * 1024),          # headroom for tm=8192 double-buffers
        cost_estimate=pl.CostEstimate(
            flops=flops, transcendentals=B, bytes_accessed=bytes_accessed),
    )(x, w1, b1, w2, b2, w3, b3)
    return out


def init_params(key, input_dim):
    """Deterministic synthetic init (uniform, PyTorch-style fan-in scaling)."""
    ks = jax.random.split(key, 6)

    def lin(kw, kb, fan_in, fan_out):
        bound = 1.0 / jnp.sqrt(fan_in)
        w = jax.random.uniform(kw, (fan_in, fan_out), jnp.float32, -bound, bound)
        b = jax.random.uniform(kb, (1, fan_out), jnp.float32, -bound, bound)
        return w, b

    w1, b1 = lin(ks[0], ks[1], input_dim, 64)
    w2, b2 = lin(ks[2], ks[3], 64, 32)
    w3, b3 = lin(ks[4], ks[5], 32, 1)
    return {"w1": w1, "b1": b1, "w2": w2, "b2": b2, "w3": w3, "b3": b3}


def gpa_reference(x, p):
    h1 = jnp.maximum(x @ p["w1"] + p["b1"], 0.0)
    h2 = jnp.maximum(h1 @ p["w2"] + p["b2"], 0.0)
    return jax.nn.sigmoid(h2 @ p["w3"].reshape(-1, 1) + p["b3"].reshape(1, 1))


if __name__ == "__main__":
    key = jax.random.PRNGKey(0)
    k_x, k_p = jax.random.split(key)

    B, D = 8, 32                      # small synthetic shapes: batch=8, input_dim=32
    x = jax.random.normal(k_x, (B, D), jnp.float32)
    params = init_params(k_p, D)

    out = jax.block_until_ready(gpa_forward(x, params))
    ref = gpa_reference(x, params)    # pure f32 reference
    assert out.shape == (B, 1)
    # bf16 MXU operands -> relaxed tolerance vs. the f32 reference
    assert jnp.allclose(out, ref, atol=2e-2, rtol=2e-2), (
        f"max abs err {jnp.max(jnp.abs(out - ref))}")

    # Extra sanity check: multi-tile grid with a ragged last tile (no jnp.pad path).
    B2 = 1000
    x2 = jax.random.normal(k_x, (B2, D), jnp.float32)
    out2 = jax.block_until_ready(gpa_forward(x2, params, tm=256))
    ref2 = gpa_reference(x2, params)
    assert out2.shape == (B2, 1)
    assert jnp.allclose(out2, ref2, atol=2e-2, rtol=2e-2), (
        f"max abs err {jnp.max(jnp.abs(out2 - ref2))}")

    print("KERNEL_OK")
</pallas_src>

<mosaic_0001>
module attributes {stable_mosaic.version = 11 : i64} {
  func.func @gpa_kernel(%arg0: i32, %arg1: memref<8x32xf32, #tpu.memory_space<vmem>>, %arg2: memref<32x64xbf16, #tpu.memory_space<vmem>>, %arg3: memref<1x64xbf16, #tpu.memory_space<vmem>>, %arg4: memref<64x32xbf16, #tpu.memory_space<vmem>>, %arg5: memref<1x32xbf16, #tpu.memory_space<vmem>>, %arg6: memref<1x32xf32, #tpu.memory_space<vmem>>, %arg7: memref<1x1xf32, #tpu.memory_space<vmem>>, %arg8: memref<8x1xf32, #tpu.memory_space<vmem>>) attributes {dimension_semantics = [#tpu.dimension_semantics<parallel>], iteration_bounds = array<i64: 1>, scalar_prefetch = 0 : i64, scratch_operands = 0 : i64, tpu.core_type = #tpu.core_type<tc>, window_params = [{transform_indices = @transform_0, window_bounds = array<i64: 8, 32>}, {pipeline_mode = #tpu.pipeline_mode<synchronous>, transform_indices = @transform_1, window_bounds = array<i64: 32, 64>}, {pipeline_mode = #tpu.pipeline_mode<synchronous>, transform_indices = @transform_2, window_bounds = array<i64: 1, 64>}, {pipeline_mode = #tpu.pipeline_mode<synchronous>, transform_indices = @transform_3, window_bounds = array<i64: 64, 32>}, {pipeline_mode = #tpu.pipeline_mode<synchronous>, transform_indices = @transform_4, window_bounds = array<i64: 1, 32>}, {pipeline_mode = #tpu.pipeline_mode<synchronous>, transform_indices = @transform_5, window_bounds = array<i64: 1, 32>}, {pipeline_mode = #tpu.pipeline_mode<synchronous>, transform_indices = @transform_6, window_bounds = array<i64: 1, 1>}, {transform_indices = @transform_7, window_bounds = array<i64: 8, 1>}]} {
    %c0 = arith.constant 0 : index
    %c0_0 = arith.constant 0 : index
    %0 = vector.load %arg1[%c0, %c0_0] : memref<8x32xf32, #tpu.memory_space<vmem>>, vector<8x32xf32>
    %1 = arith.truncf %0 : vector<8x32xf32> to vector<8x32xbf16>
    %c0_1 = arith.constant 0 : index
    %c0_2 = arith.constant 0 : index
    %2 = vector.load %arg2[%c0_1, %c0_2] : memref<32x64xbf16, #tpu.memory_space<vmem>>, vector<32x64xbf16>
    %cst = arith.constant dense<0.000000e+00> : vector<8x64xf32>
    %3 = tpu.matmul %1, %2, %cst {dimension_numbers = #tpu.dot_dimension_numbers<[1], [0], [0], [1], [0, 0, 1, 1], [], []>} : vector<8x32xbf16>, vector<32x64xbf16>, vector<8x64xf32> -> vector<8x64xf32>
    %4 = arith.truncf %3 : vector<8x64xf32> to vector<8x64xbf16>
    %c0_3 = arith.constant 0 : index
    %c0_4 = arith.constant 0 : index
    %5 = vector.load %arg3[%c0_3, %c0_4] : memref<1x64xbf16, #tpu.memory_space<vmem>>, vector<1x64xbf16>
    %6 = vector.broadcast %5 : vector<1x64xbf16> to vector<8x64xbf16>
    %7 = arith.addf %4, %6 : vector<8x64xbf16>
    %cst_5 = arith.constant 0.000000e+00 : bf16
    %8 = vector.broadcast %cst_5 : bf16 to vector<8x64xbf16>
    %9 = arith.maximumf %7, %8 : vector<8x64xbf16>
    %c0_6 = arith.constant 0 : index
    %c0_7 = arith.constant 0 : index
    %10 = vector.load %arg4[%c0_6, %c0_7] : memref<64x32xbf16, #tpu.memory_space<vmem>>, vector<64x32xbf16>
    %cst_8 = arith.constant dense<0.000000e+00> : vector<8x32xf32>
    %11 = tpu.matmul %9, %10, %cst_8 {dimension_numbers = #tpu.dot_dimension_numbers<[1], [0], [0], [1], [0, 0, 1, 1], [], []>} : vector<8x64xbf16>, vector<64x32xbf16>, vector<8x32xf32> -> vector<8x32xf32>
    %12 = arith.truncf %11 : vector<8x32xf32> to vector<8x32xbf16>
    %c0_9 = arith.constant 0 : index
    %c0_10 = arith.constant 0 : index
    %13 = vector.load %arg5[%c0_9, %c0_10] : memref<1x32xbf16, #tpu.memory_space<vmem>>, vector<1x32xbf16>
    %14 = vector.broadcast %13 : vector<1x32xbf16> to vector<8x32xbf16>
    %15 = arith.addf %12, %14 : vector<8x32xbf16>
    %cst_11 = arith.constant 0.000000e+00 : bf16
    %16 = vector.broadcast %cst_11 : bf16 to vector<8x32xbf16>
    %17 = arith.maximumf %15, %16 : vector<8x32xbf16>
    %c0_12 = arith.constant 0 : index
    %c0_13 = arith.constant 0 : index
    %18 = vector.load %arg6[%c0_12, %c0_13] : memref<1x32xf32, #tpu.memory_space<vmem>>, vector<1x32xf32>
    %19 = arith.extf %17 : vector<8x32xbf16> to vector<8x32xf32>
    %20 = vector.broadcast %18 : vector<1x32xf32> to vector<8x32xf32>
    %21 = arith.mulf %19, %20 : vector<8x32xf32>
    %cst_14 = arith.constant dense<0.000000e+00> : vector<8xf32>
    %22 = vector.multi_reduction <add>, %21, %cst_14 [1] : vector<8x32xf32> to vector<8xf32>
    %23 = vector.shape_cast %22 : vector<8xf32> to vector<8x1xf32>
    %c0_15 = arith.constant 0 : index
    %c0_16 = arith.constant 0 : index
    %24 = vector.load %arg7[%c0_15, %c0_16] : memref<1x1xf32, #tpu.memory_space<vmem>>, vector<1x1xf32>
    %25 = vector.broadcast %24 : vector<1x1xf32> to vector<8x1xf32>
    %26 = arith.addf %23, %25 : vector<8x1xf32>
    %27 = arith.negf %26 : vector<8x1xf32>
    %28 = math.exp %27 : vector<8x1xf32>
    %cst_17 = arith.constant 1.000000e+00 : f32
    %29 = vector.broadcast %cst_17 : f32 to vector<8x1xf32>
    %30 = arith.addf %29, %28 : vector<8x1xf32>
    %31 = arith.divf %29, %30 : vector<8x1xf32>
    %c0_18 = arith.constant 0 : index
    %c0_19 = arith.constant 0 : index
    %32 = vector.load %arg8[%c0_18, %c0_19] : memref<8x1xf32, #tpu.memory_space<vmem>>, vector<8x1xf32>
    tpu.vector_store %arg8[%c0_18, %c0_19], %31 {strides = array<i32>} : memref<8x1xf32, #tpu.memory_space<vmem>>, vector<8x1xf32>,
    return
  }
  func.func @transform_0(%arg0: i32) -> (i32, i32) {
    %c0_i32 = arith.constant 0 : i32
    %c0_i32_0 = arith.constant 0 : i32
    return %arg0, %c0_i32 : i32, i32
  }
  func.func @transform_1(%arg0: i32) -> (i32, i32) {
    %c0_i32 = arith.constant 0 : i32
    %c0_i32_0 = arith.constant 0 : i32
    %c0_i32_1 = arith.constant 0 : i32
    return %c0_i32, %c0_i32_0 : i32, i32
  }
  func.func @transform_2(%arg0: i32) -> (i32, i32) {
    %c0_i32 = arith.constant 0 : i32
    %c0_i32_0 = arith.constant 0 : i32
    %c0_i32_1 = arith.constant 0 : i32
    return %c0_i32, %c0_i32_0 : i32, i32
  }
  func.func @transform_3(%arg0: i32) -> (i32, i32) {
    %c0_i32 = arith.constant 0 : i32
    %c0_i32_0 = arith.constant 0 : i32
    %c0_i32_1 = arith.constant 0 : i32
    return %c0_i32, %c0_i32_0 : i32, i32
  }
  func.func @transform_4(%arg0: i32) -> (i32, i32) {
    %c0_i32 = arith.constant 0 : i32
    %c0_i32_0 = arith.constant 0 : i32
    %c0_i32_1 = arith.constant 0 : i32
    return %c0_i32, %c0_i32_0 : i32, i32
  }
  func.func @transform_5(%arg0: i32) -> (i32, i32) {
    %c0_i32 = arith.constant 0 : i32
    %c0_i32_0 = arith.constant 0 : i32
    %c0_i32_1 = arith.constant 0 : i32
    return %c0_i32, %c0_i32_0 : i32, i32
  }
  func.func @transform_6(%arg0: i32) -> (i32, i32) {
    %c0_i32 = arith.constant 0 : i32
    %c0_i32_0 = arith.constant 0 : i32
    %c0_i32_1 = arith.constant 0 : i32
    return %c0_i32, %c0_i32_0 : i32, i32
  }
  func.func @transform_7(%arg0: i32) -> (i32, i32) {
    %c0_i32 = arith.constant 0 : i32
    %c0_i32_0 = arith.constant 0 : i32
    return %arg0, %c0_i32 : i32, i32
  }
}

</mosaic_0001>

<llo_original>
// kernel: tpu_custom_call.1
$region0: #{tpu_custom_call.1}
  #allocation0 [shape = 'u32[]', space=smem, size = 0x4, offset = 0x4, fixed_abs, tag = 'smem constant byte address 0x4 - core index']
  #allocation1 [shape = 'u32[72,128]{1,0:T(1,128)}', space=vmem, size = 0x9000, scoped, tag = 'internal scratch']
  #allocation2 [shape = 'f32[1,1]{1,0:T(1,128)S(1)}', space=vmem, size = 0x200, scoped, tag = 'scoped memory for tpu_custom_call.1']
  %s0 = inlined_call_operand.vmem [shape: f32[8,32], index: 0, kind: input, shape index: {}]
  %s1 = inlined_call_operand.vmem [shape: bf16[32,64], index: 1, kind: input, shape index: {}]
  %s2 = inlined_call_operand.vmem [shape: bf16[1,64], index: 2, kind: input, shape index: {}]
  %s3 = inlined_call_operand.vmem [shape: bf16[64,32], index: 3, kind: input, shape index: {}]
  %s4 = inlined_call_operand.vmem [shape: bf16[1,32], index: 4, kind: input, shape index: {}]
  %s5 = inlined_call_operand.vmem [shape: f32[1,32], index: 5, kind: input, shape index: {}]
  %s6 = inlined_call_operand.<no memory space> [shape: f32[1,1], index: 6, kind: input, shape index: {}]
  %s7 = inlined_call_operand.vmem [shape: f32[8,1], index: 7, kind: output, shape index: {}]
  %s8 = sld [smem:[#allocation0]]
  $region38: #{tpu_custom_call.1} parent=0
    _
  %s10 = ssub.s32 1, %s8
  %s11 = scalar_select 0, %s10, %s8
  %v12 = vstv %s6
  %13 = vst [vmem:[#allocation2] sm:$0x1] %v12
  // Predicated region
  $region2: #{tpu_custom_call.1} parent=0 // pred_check
    _
  $region3: #{tpu_custom_call.1} parent=0 // pred_check_branch
    %15 = sbr.rel (0) target = $region5
  $region4: #{tpu_custom_call.1} parent=0 // pred_region
    _
  $region5: #{tpu_custom_call.1} parent=0 // pred_fallthru
    _
  // Predicated region
  $region6: #{tpu_custom_call.1} parent=0 // pred_check
    _
  $region7: #{tpu_custom_call.1} parent=0 // pred_check_branch
    %17 = sbr.rel (0) target = $region9
  $region8: #{tpu_custom_call.1} parent=0 // pred_region
    _
  $region9: #{tpu_custom_call.1} parent=0 // pred_fallthru
    _
  // Predicated region
  $region10: #{tpu_custom_call.1} parent=0 // pred_check
    _
  $region11: #{tpu_custom_call.1} parent=0 // pred_check_branch
    %19 = sbr.rel (0) target = $region13
  $region12: #{tpu_custom_call.1} parent=0 // pred_region
    _
  $region13: #{tpu_custom_call.1} parent=0 // pred_fallthru
    _
  // Predicated region
  $region14: #{tpu_custom_call.1} parent=0 // pred_check
    _
  $region15: #{tpu_custom_call.1} parent=0 // pred_check_branch
    %21 = sbr.rel (0) target = $region17
  $region16: #{tpu_custom_call.1} parent=0 // pred_region
    _
  $region17: #{tpu_custom_call.1} parent=0 // pred_fallthru
    _
  // Predicated region
  $region18: #{tpu_custom_call.1} parent=0 // pred_check
    _
  $region19: #{tpu_custom_call.1} parent=0 // pred_check_branch
    %23 = sbr.rel (0) target = $region21
  $region20: #{tpu_custom_call.1} parent=0 // pred_region
    _
  $region21: #{tpu_custom_call.1} parent=0 // pred_fallthru
    _
  // Predicated region
  $region22: #{tpu_custom_call.1} parent=0 // pred_check
    _
  $region23: #{tpu_custom_call.1} parent=0 // pred_check_branch
    %25 = sbr.rel (0) target = $region25
  $region24: #{tpu_custom_call.1} parent=0 // pred_region
    _
  $region25: #{tpu_custom_call.1} parent=0 // pred_fallthru
    _
  // Predicated region
  $region26: #{tpu_custom_call.1} parent=0 // pred_check
    _
  $region27: #{tpu_custom_call.1} parent=0 // pred_check_branch
    %27 = sbr.rel (0) target = $region29
  $region28: #{tpu_custom_call.1} parent=0 // pred_region
    _
  $region29: #{tpu_custom_call.1} parent=0 // pred_fallthru
    _
  %v29 = vld [vmem:[%s0] sm:$0xff]
  %v30 = vpack.c.bf16 %v29, %v29
  %v31 = vld [vmem:[%s1] sm:$0xf]
  %v32 = vld [vmem:[%s1 + $0x4] sm:$0xf]
  %v33 = vld [vmem:[%s1 + $0x8] sm:$0xf]
  %v34 = vld [vmem:[%s1 + $0xc] sm:$0xf]
  %v39 = vunpack.c.l.b16 %v31
  %v40 = vunpack.c.l.b16 %v32
  %v41 = vunpack.c.l.b16 %v33
  %v42 = vunpack.c.l.b16 %v34
  %v43 = vpack.c.b16 %v40, %v39
  %v44 = vpack.c.b16 %v42, %v41
  %vm47 = vcmask 261120
  %v49 = vsel %vm47, %v30, 0
  %51 = vmatpush.bf16.msra.mxu0 0
  %52 = vmatpush.bf16.msra.mxu0 0
  %53 = vmatpush.bf16.msra.mxu0 0
  %54 = vmatpush.bf16.msra.mxu0 0
  %55 = vmatpush.bf16.msra.mxu0 0
  %56 = vmatpush.bf16.msra.mxu0 0
  %57 = vmatpush.bf16.msra.mxu0 %v44
  %58 = vmatpush.bf16.msra.mxu0 %v43
  %59 = vmatmul.bf16.gmra.mxu0 %v49
  %v60 = vpop.f32.mrf.mxu0
  %v61 = vadd.f32 0.0, %v60
  %v62 = vpop.f32.mrf.mxu0
  %63 = vdwg.mxu0
  %v64 = vpack.c.bf16 %v61, %v61
  %v65 = vld [vmem:[%s2] sm:$0x1]
  %v67 = vpack.i.b16 %v65, %v65
  %v69 = vperm.slane %v67, 0
  %v70 = vunpack.c.l.bf16 %v64
  %v71 = vunpack.c.l.bf16 %v69
  %v72 = vadd.f32 %v70, %v71
  %v73 = vpack.c.bf16 %v72, %v72
  %v74 = vunpack.c.l.bf16 %v73
  %v75 = vmax.f32 %v74, 0.0
  %v76 = vpack.c.bf16 %v75, %v75
  %v77 = vld [vmem:[%s3] sm:$0xf]
  %v78 = vld [vmem:[%s3 + $0x4] sm:$0xf]
  %v79 = vld [vmem:[%s3 + $0x8] sm:$0xf]
  %v80 = vld [vmem:[%s3 + $0xc] sm:$0xf]
  %v81 = vld [vmem:[%s3 + $0x10] sm:$0xf]
  %v82 = vld [vmem:[%s3 + $0x14] sm:$0xf]
  %v83 = vld [vmem:[%s3 + $0x18] sm:$0xf]
  %v84 = vld [vmem:[%s3 + $0x1c] sm:$0xf]
  %v93 = vunpack.c.l.b16 %v77
  %v94 = vunpack.c.l.b16 %v78
  %v95 = vunpack.c.l.b16 %v79
  %v96 = vunpack.c.l.b16 %v80
  %v97 = vunpack.c.l.b16 %v81
  %v98 = vunpack.c.l.b16 %v82
  %v99 = vunpack.c.l.b16 %v83
  %v100 = vunpack.c.l.b16 %v84
  %v101 = vpack.c.b16 %v94, %v93
  %v102 = vpack.c.b16 %v96, %v95
  %v103 = vpack.c.b16 %v98, %v97
  %v104 = vpack.c.b16 %v100, %v99
  %vm109 = vcmask 523264
  %v111 = vsel %vm109, %v76, 0
  %113 = vmatpush.bf16.msra.mxu0 0
  %114 = vmatpush.bf16.msra.mxu0 0
  %115 = vmatpush.bf16.msra.mxu0 0
  %116 = vmatpush.bf16.msra.mxu0 0
  %117 = vmatpush.bf16.msra.mxu0 %v104
  %118 = vmatpush.bf16.msra.mxu0 %v103
  %119 = vmatpush.bf16.msra.mxu0 %v102
  %120 = vmatpush.bf16.msra.mxu0 %v101
  %121 = vmatmul.bf16.gmra.mxu0 %v111
  %v122 = vpop.f32.mrf.mxu0
  %v123 = vadd.f32 0.0, %v122
  %v124 = vpop.f32.mrf.mxu0
  %125 = vdwg.mxu0
  %v126 = vpack.c.bf16 %v123, %v123
  %v127 = vld [vmem:[%s4] sm:$0x1]
  %v129 = vpack.i.b16 %v127, %v127
  %v131 = vperm.slane %v129, 0
  %v132 = vunpack.c.l.bf16 %v126
  %v133 = vunpack.c.l.bf16 %v131
  %v134 = vadd.f32 %v132, %v133
  %v135 = vpack.c.bf16 %v134, %v134
  %v136 = vunpack.c.l.bf16 %v135
  %v137 = vmax.f32 %v136, 0.0
  %v138 = vpack.c.bf16 %v137, %v137
  %v139 = vld [vmem:[%s5] sm:$0x1]
  %v140 = vunpack.c.l.bf16 %v138
  %v142 = vperm.slane %v139, 0
  %v144 = vmul.f32 %v140, %v142
  %v145 = vsel %vm47, %v144, 0.0
  %146 = vadd.xlane.f32.xlu0 %v145
  %v147 = vpop.xlane.xlu0 %146
  %v148 = vld [vmem:[#allocation2] sm:$0x1]
  %v150 = vperm.slane %v148, 0
  %v152 = vadd.f32 %v147, %v150
  %v153 = vxor.u32 %v152, 2147483648
  %v154 = vmul.f32 %v153, 1.442695
  %v155 = vpow.pop %v154
  %v156 = vadd.f32 %v155, 1.0
  %v157 = vrcp.pop %v156
  %v158 = vmul.f32 %v156, %v157
  %v159 = vsub.f32 1.0, %v158
  %v160 = vmul.f32 %v157, %v159
  %v161 = vadd.f32 %v157, %v160
  %vm162 = vweird.f32 %v156
  %vm163 = vweird.f32 %v157
  %vm164 = vmor %vm162, %vm163
  %v165 = vsel %vm164, %v157, %v161
  %v166 = vand.u32 2147483647, %v156
  %vm167 = vcmp.eq.f32.partialorder %v166, 8.507059e+37
  %v168 = vand.u32 %v156, 2147483648
  %v169 = vor.u32 1.1754944e-38, %v168
  %v170 = vsel %vm167, %v169, %v165
  %v171 = vmul.f32 1.0, %v170
  %vm172 = vcmask 7168
  %173 = vst.msk [vmem:[%s7] sm:$0xff] %vm172, %v171
  // Predicated region
  $region30: #{tpu_custom_call.1} parent=0 // pred_check
    _
  $region31: #{tpu_custom_call.1} parent=0 // pred_check_branch
    %175 = sbr.rel (0) target = $region33
  $region32: #{tpu_custom_call.1} parent=0 // pred_region
    _
  $region33: #{tpu_custom_call.1} parent=0 // pred_fallthru
    _
  // Predicated region
  $region34: #{tpu_custom_call.1} parent=0 // pred_check
    _
  $region35: #{tpu_custom_call.1} parent=0 // pred_check_branch
    %177 = sbr.rel (0) target = $region37
  $region36: #{tpu_custom_call.1} parent=0 // pred_region
    _
  $region37: #{tpu_custom_call.1} parent=0 // pred_fallthru
    _

</llo_original>
